<compile_context>
chip_gen: v6e
topology: v6e:2x2x1
jax: 0.10.0
libtpu: 0.0.40
codegen_flags: <defaults>
</compile_context>

<pallas_src>
import jax
import jax.numpy as jnp
from jax.experimental import pallas as pl
from jax.experimental.pallas import tpu as pltpu

_MIB = 1024 * 1024


# ------------------------------- kernels ------------------------------------

def _reparam_kernel_host_eps(mean_ref, logvar_ref, eps_ref, out_ref):
    """Fused z = mean + exp(0.5 * logvar) * eps, with eps streamed from HBM."""
    std = jnp.exp(logvar_ref[...].astype(jnp.float32) * 0.5)
    z = mean_ref[...].astype(jnp.float32) + std * eps_ref[...].astype(jnp.float32)
    out_ref[...] = z.astype(out_ref.dtype)


def _reparam_kernel_tpu_prng(seed_ref, mean_ref, logvar_ref, out_ref):
    """Fused z = mean + exp(0.5 * logvar) * eps, eps drawn from the HW PRNG."""
    tile = pl.program_id(0)
    # Hash-mix the per-tile seed so adjacent tiles don't get correlated streams.
    # Relies on well-defined int32 wrap-around (XLA semantics).
    mixed = (seed_ref[0] ^ (tile * jnp.int32(-1640531535))) + tile
    pltpu.prng_seed(mixed)

    shape = mean_ref.shape
    if hasattr(pltpu, "stateful_normal"):
        eps = pltpu.stateful_normal(shape, jnp.float32)
    else:
        # Box-Muller fallback: produce TWO normals per (u1, u2) pair so it costs
        # half the PRNG draws / log / sqrt of the naive single-branch version.
        def _uniform(s):
            bits = pltpu.bitcast(pltpu.prng_random_bits(s), jnp.uint32)
            return 1.0 - (bits >> 8).astype(jnp.float32) * (1.0 / (1 << 24))

        two_pi = jnp.float32(2.0 * 3.141592653589793)
        if shape[0] % 2 == 0:
            half = shape[0] // 2
            u1, u2 = _uniform((half, shape[1])), _uniform((half, shape[1]))
            r = jnp.sqrt(-2.0 * jnp.log(u1))
            theta = two_pi * u2
            eps = jnp.concatenate([r * jnp.cos(theta), r * jnp.sin(theta)], axis=0)
        else:
            u1, u2 = _uniform(shape), _uniform(shape)
            eps = jnp.sqrt(-2.0 * jnp.log(u1)) * jnp.cos(two_pi * u2)

    std = jnp.exp(logvar_ref[...].astype(jnp.float32) * 0.5)
    z = mean_ref[...].astype(jnp.float32) + std * eps
    out_ref[...] = z.astype(out_ref.dtype)


# ------------------------------ tiling plan ----------------------------------

def _plan_layout(n, itemsize):
    """Flatten n elements into a lane-dense (rows, cols) slab and pick a tile.

    Returns (rows, cols, block_rows, padded_n); padded_n >= n is the element
    count after padding to a whole (min_rows, cols) tile multiple.
    """
    min_rows = 8 if itemsize >= 4 else 16  # native sublane tile (bf16 packs 2/row)

    cols = None
    padded_n = n
    for c in (4096, 2048, 1024, 512, 256, 128):
        if n % c == 0 and (n // c) % min_rows == 0:
            cols = c
            break
    if cols is None:
        # Awkward sizes: pad to a full tile multiple and slice the padding off
        # in the wrapper (keeps pipelining + unmasked stores; waste <= 16 KiB).
        cols = 512
        tile_elems = min_rows * cols
        padded_n = ((n + tile_elems - 1) // tile_elems) * tile_elems
    rows = padded_n // cols

    # ~4 MiB blocks: measured f32 elementwise sits at ~86% of HBM roofline there
    # and 2 buffers x 3 operands x 4 MiB = 24 MiB fits every generation's VMEM
    # once vmem_limit_bytes is set explicitly.
    budget_rows = max(min_rows, (4 * _MIB) // (cols * itemsize))
    block_rows = rows  # legal fallback (full dim); the loop below always hits.
    for cand in (8192, 4096, 2048, 1024, 512, 256, 128, 64, 32, 16, 8):
        if cand < min_rows:
            continue
        if cand <= rows and cand <= budget_rows and rows % cand == 0:
            block_rows = cand
            break

    # v7x has two TensorCores: with dimension_semantics=("parallel",) the grid is
    # sharded across them, so prefer >= 2 blocks (and an even count) whenever the
    # slab is big enough to split.
    grid = rows // block_rows
    if (grid == 1 or grid % 2 == 1) and block_rows % 2 == 0 \
            and block_rows // 2 >= min_rows and rows % (block_rows // 2) == 0:
        block_rows //= 2

    return rows, cols, block_rows, padded_n


# -------------------------------- wrapper ------------------------------------

def reparametrization(z_mean, z_var, *, key=None, seed=0, training=True,
                      donate_mean=False):
    """Pallas implementation of Reparametrization.forward."""
    if not training:
        return z_mean  # eval path: identity on z_mean

    assert z_mean.shape == z_var.shape, "z_mean / z_var shape mismatch"
    orig_shape = z_mean.shape
    dtype = z_mean.dtype
    n = z_mean.size
    itemsize = jnp.dtype(dtype).itemsize

    rows, cols, block_rows, padded_n = _plan_layout(n, itemsize)

    mean_flat = z_mean.reshape(-1)
    logvar_flat = z_var.reshape(-1)
    if padded_n != n:
        pad = padded_n - n
        mean_flat = jnp.pad(mean_flat, (0, pad))      # padded std=exp(0)=1, sliced off
        logvar_flat = jnp.pad(logvar_flat, (0, pad))
    mean2d = mean_flat.reshape(rows, cols)
    logvar2d = logvar_flat.reshape(rows, cols)

    grid = (rows // block_rows,)
    block = (block_rows, cols)
    block_bytes = block_rows * cols * itemsize

    # NOTE: trace-time backend check; correct when tracing and executing on the
    # same backend (the supported configuration here).
    on_tpu = jax.default_backend() == "tpu"
    n_operands = 3 if on_tpu else 4

    # Explicit scoped-VMEM limit: double-buffered operands + room for the f32
    # elementwise temporaries. v5e's 16 MiB scoped default is the tightest;
    # 48 MiB still leaves headroom under v7x's 64 MiB physical VMEM.
    vmem_limit = int(min(48 * _MIB,
                         max(32 * _MIB,
                             2 * n_operands * block_bytes + 3 * block_bytes + 8 * _MIB)))

    cost = pl.CostEstimate(flops=2 * padded_n,
                           transcendentals=padded_n,
                           bytes_accessed=3 * padded_n * itemsize)
    cparams = pltpu.CompilerParams(dimension_semantics=("parallel",),
                                   vmem_limit_bytes=vmem_limit)

    if on_tpu:
        # eps is drawn in-kernel from the hardware PRNG: no extra HBM pass.
        seed_arr = jnp.asarray([seed], dtype=jnp.int32)
        # Input 1 (mean2d; input 0 is the scalar-prefetch seed) can be donated
        # into output 0 when the caller no longer needs z_mean.
        io_alias = {1: 0} if donate_mean else {}
        out2d = pl.pallas_call(
            _reparam_kernel_tpu_prng,
            out_shape=jax.ShapeDtypeStruct((rows, cols), dtype),
            grid_spec=pltpu.PrefetchScalarGridSpec(
                num_scalar_prefetch=1,
                grid=grid,
                in_specs=[
                    pl.BlockSpec(block, lambda i, seed_ref: (i, 0)),
                    pl.BlockSpec(block, lambda i, seed_ref: (i, 0)),
                ],
                out_specs=pl.BlockSpec(block, lambda i, seed_ref: (i, 0)),
            ),
            compiler_params=cparams,
            cost_estimate=cost,
            input_output_aliases=io_alias,
        )(seed_arr, mean2d, logvar2d)
    else:
        # Non-TPU backend: TPU PRNG primitives have no lowering there, so draw
        # eps host-side and fuse the rest in the same elementwise kernel.
        if key is None:
            key = jax.random.PRNGKey(seed)
        eps2d = jax.random.normal(key, (rows, cols), dtype=dtype)
        out2d = pl.pallas_call(
            _reparam_kernel_host_eps,
            out_shape=jax.ShapeDtypeStruct((rows, cols), dtype),
            grid=grid,
            in_specs=[pl.BlockSpec(block, lambda i: (i, 0))] * 3,
            out_specs=pl.BlockSpec(block, lambda i: (i, 0)),
            compiler_params=cparams,
            cost_estimate=cost,
        )(mean2d, logvar2d, eps2d)

    out_flat = out2d.reshape(-1)
    if padded_n != n:
        out_flat = out_flat[:n]
    return out_flat.reshape(orig_shape)


# --------------------------------- demo --------------------------------------

if __name__ == "__main__":
    key = jax.random.PRNGKey(0)
    k_mean, k_var, k_eps = jax.random.split(key, 3)

    # Small latent batch: 8 samples, 128-dim latent.
    B, D = 8, 128
    z_mean = jax.random.normal(k_mean, (B, D), dtype=jnp.float32)
    z_var = jax.random.normal(k_var, (B, D), dtype=jnp.float32) * 0.1  # log-variance

    # Training path: z = mean + exp(0.5 * logvar) * N(0, 1)
    z = reparametrization(z_mean, z_var, key=k_eps, seed=1234, training=True)
    z = jax.block_until_ready(z)
    assert z.shape == z_mean.shape and z.dtype == z_mean.dtype
    assert bool(jnp.all(jnp.isfinite(z)))
    assert not bool(jnp.allclose(z, z_mean))  # noise actually applied

    # Eval path: identity on z_mean.
    z_eval = reparametrization(z_mean, z_var, training=False)
    z_eval = jax.block_until_ready(z_eval)
    assert bool(jnp.allclose(z_eval, z_mean))

    # Larger case exercising the multi-tile path (even grid for v7x sharding).
    B2, D2 = 768, 1024
    m2 = jax.random.normal(k_mean, (B2, D2), dtype=jnp.float32)
    v2 = jax.random.normal(k_var, (B2, D2), dtype=jnp.float32) * 0.1
    z2 = jax.block_until_ready(
        reparametrization(m2, v2, key=k_eps, seed=7, training=True))
    assert z2.shape == (B2, D2) and bool(jnp.all(jnp.isfinite(z2)))

    # Awkward size exercising the pad-and-slice path (n not a multiple of 128).
    B3, D3 = 5, 100
    m3 = jax.random.normal(k_mean, (B3, D3), dtype=jnp.float32)
    v3 = jax.random.normal(k_var, (B3, D3), dtype=jnp.float32) * 0.1
    z3 = jax.block_until_ready(
        reparametrization(m3, v3, key=k_eps, seed=11, training=True))
    assert z3.shape == (B3, D3) and bool(jnp.all(jnp.isfinite(z3)))
    assert not bool(jnp.allclose(z3, m3))

    print("KERNEL_OK")
</pallas_src>

<mosaic_0001>
module attributes {stable_mosaic.version = 11 : i64} {
  func.func @_reparam_kernel_host_eps(%arg0: i32, %arg1: memref<8x128xf32, #tpu.memory_space<vmem>>, %arg2: memref<8x128xf32, #tpu.memory_space<vmem>>, %arg3: memref<8x128xf32, #tpu.memory_space<vmem>>, %arg4: memref<8x128xf32, #tpu.memory_space<vmem>>) attributes {dimension_semantics = [#tpu.dimension_semantics<parallel>], iteration_bounds = array<i64: 1>, scalar_prefetch = 0 : i64, scratch_operands = 0 : i64, tpu.core_type = #tpu.core_type<tc>, window_params = [{transform_indices = @transform_0, window_bounds = array<i64: 8, 128>}, {transform_indices = @transform_1, window_bounds = array<i64: 8, 128>}, {transform_indices = @transform_2, window_bounds = array<i64: 8, 128>}, {transform_indices = @transform_3, window_bounds = array<i64: 8, 128>}]} {
    %c0 = arith.constant 0 : index
    %c0_0 = arith.constant 0 : index
    %0 = vector.load %arg2[%c0, %c0_0] : memref<8x128xf32, #tpu.memory_space<vmem>>, vector<8x128xf32>
    %cst = arith.constant 5.000000e-01 : f32
    %1 = vector.broadcast %cst : f32 to vector<8x128xf32>
    %2 = arith.mulf %0, %1 : vector<8x128xf32>
    %3 = math.exp %2 : vector<8x128xf32>
    %c0_1 = arith.constant 0 : index
    %c0_2 = arith.constant 0 : index
    %4 = vector.load %arg1[%c0_1, %c0_2] : memref<8x128xf32, #tpu.memory_space<vmem>>, vector<8x128xf32>
    %c0_3 = arith.constant 0 : index
    %c0_4 = arith.constant 0 : index
    %5 = vector.load %arg3[%c0_3, %c0_4] : memref<8x128xf32, #tpu.memory_space<vmem>>, vector<8x128xf32>
    %6 = arith.mulf %3, %5 : vector<8x128xf32>
    %7 = arith.addf %4, %6 : vector<8x128xf32>
    %c0_5 = arith.constant 0 : index
    %c0_6 = arith.constant 0 : index
    %8 = vector.load %arg4[%c0_5, %c0_6] : memref<8x128xf32, #tpu.memory_space<vmem>>, vector<8x128xf32>
    tpu.vector_store %arg4[%c0_5, %c0_6], %7 {strides = array<i32>} : memref<8x128xf32, #tpu.memory_space<vmem>>, vector<8x128xf32>,
    return
  }
  func.func @transform_0(%arg0: i32) -> (i32, i32) {
    %c0_i32 = arith.constant 0 : i32
    %c0_i32_0 = arith.constant 0 : i32
    return %arg0, %c0_i32 : i32, i32
  }
  func.func @transform_1(%arg0: i32) -> (i32, i32) {
    %c0_i32 = arith.constant 0 : i32
    %c0_i32_0 = arith.constant 0 : i32
    return %arg0, %c0_i32 : i32, i32
  }
  func.func @transform_2(%arg0: i32) -> (i32, i32) {
    %c0_i32 = arith.constant 0 : i32
    %c0_i32_0 = arith.constant 0 : i32
    return %arg0, %c0_i32 : i32, i32
  }
  func.func @transform_3(%arg0: i32) -> (i32, i32) {
    %c0_i32 = arith.constant 0 : i32
    %c0_i32_0 = arith.constant 0 : i32
    return %arg0, %c0_i32 : i32, i32
  }
}

</mosaic_0001>

<llo_original>
// kernel: tpu_custom_call.1
$region0: #{tpu_custom_call.1}
  #allocation0 [shape = 'u32[]', space=smem, size = 0x4, offset = 0x4, fixed_abs, tag = 'smem constant byte address 0x4 - core index']
  #allocation1 [shape = 'u32[144,128]{1,0:T(1,128)}', space=vmem, size = 0x12000, scoped, tag = 'internal scratch']
  %s0 = inlined_call_operand.hbm [shape: f32[8,128], index: 0, kind: input, shape index: {}]
  %s1 = inlined_call_operand.hbm [shape: f32[8,128], index: 1, kind: input, shape index: {}]
  %s2 = inlined_call_operand.hbm [shape: f32[8,128], index: 2, kind: input, shape index: {}]
  %s3 = inlined_call_operand.hbm [shape: f32[8,128], index: 3, kind: output, shape index: {}]
  %s4 = sld [smem:[#allocation0]]
  $region34: #{tpu_custom_call.1} parent=0
    _
  %s6 = ssub.s32 1, %s4
  %s7 = scalar_select 0, %s6, %s4
  $region1: #{tpu_custom_call.1} parent=0
    #allocation2 [shape = 'u8[4096]{0}', space=vmem, size = 0x1000, scoped, tag = 'input window, operand 0, single buffered']
    #allocation3 [shape = 's32[1]{0}', space=sflag, size = 0x4, scoped, tag = 'scoped memory for tpu_custom_call.1']
    #allocation4 [shape = 's32[1]{0}', space=sflag, size = 0x4, scoped, tag = 'scoped memory for tpu_custom_call.1']
    #allocation5 [shape = 'u8[4096]{0}', space=vmem, size = 0x1000, scoped, tag = 'input window, operand 1, single buffered']
    #allocation6 [shape = 's32[1]{0}', space=sflag, size = 0x4, scoped, tag = 'scoped memory for tpu_custom_call.1']
    #allocation7 [shape = 'u8[4096]{0}', space=vmem, size = 0x1000, scoped, tag = 'input window, operand 2, single buffered']
    #allocation8 [shape = 'u8[4096]{0}', space=vmem, size = 0x1000, scoped, tag = 'output window, operand 0, single buffered']
    %8 = vsyncpa [#allocation3], 0
    %9 = vsyncpa [#allocation6], 0
    %10 = vsyncpa [#allocation4], 0
    // Predicated region
    $region2: #{tpu_custom_call.1} parent=1 // pred_check
      _
    $region3: #{tpu_custom_call.1} parent=1 // pred_check_branch
      %12 = sbr.rel (0) target = $region5
    $region4: #{tpu_custom_call.1} parent=1 // pred_region
      %s14 = ssub.s32 128, 128
      %15 = vsyncadd [#allocation3], %s14
      %s17 = sshll.u32 [#allocation2], 4
      %s18 = int_to_ptr.vmem [resolvable:$true] %s17
      %20 = dma.hbm_to_vmem [thread:$0]  %s0, 128, %s18, [#allocation3]
    $region5: #{tpu_custom_call.1} parent=1 // pred_fallthru
      _
    // Predicated region
    $region6: #{tpu_custom_call.1} parent=1 // pred_check
      _
    $region7: #{tpu_custom_call.1} parent=1 // pred_check_branch
      %22 = sbr.rel (0) target = $region9
    $region8: #{tpu_custom_call.1} parent=1 // pred_region
      %s24 = ssub.s32 128, 128
      %25 = vsyncadd [#allocation6], %s24
      %s27 = sshll.u32 [#allocation5], 4
      %s28 = int_to_ptr.vmem [resolvable:$true] %s27
      %30 = dma.hbm_to_vmem [thread:$0]  %s1, 128, %s28, [#allocation6]
    $region9: #{tpu_custom_call.1} parent=1 // pred_fallthru
      _
    // Predicated region
    $region10: #{tpu_custom_call.1} parent=1 // pred_check
      _
    $region11: #{tpu_custom_call.1} parent=1 // pred_check_branch
      %32 = sbr.rel (0) target = $region13
    $region12: #{tpu_custom_call.1} parent=1 // pred_region
      %s34 = ssub.s32 128, 128
      %35 = vsyncadd [#allocation6], %s34
      %s37 = sshll.u32 [#allocation7], 4
      %s38 = int_to_ptr.vmem [resolvable:$true] %s37
      %40 = dma.hbm_to_vmem [thread:$0]  %s2, 128, %s38, [#allocation6]
    $region13: #{tpu_custom_call.1} parent=1 // pred_fallthru
      _
    // Predicated region
    $region14: #{tpu_custom_call.1} parent=1 // pred_check
      _
    $region15: #{tpu_custom_call.1} parent=1 // pred_check_branch
      %42 = sbr.rel (0) target = $region17
    $region16: #{tpu_custom_call.1} parent=1 // pred_region
      %43 = dma.done [#allocation3], 128
    $region17: #{tpu_custom_call.1} parent=1 // pred_fallthru
      _
    // Predicated region
    $region18: #{tpu_custom_call.1} parent=1 // pred_check
      _
    $region19: #{tpu_custom_call.1} parent=1 // pred_check_branch
      %45 = sbr.rel (0) target = $region21
    $region20: #{tpu_custom_call.1} parent=1 // pred_region
      %46 = dma.done [#allocation6], 128
    $region21: #{tpu_custom_call.1} parent=1 // pred_fallthru
      _
    // Predicated region
    $region22: #{tpu_custom_call.1} parent=1 // pred_check
      _
    $region23: #{tpu_custom_call.1} parent=1 // pred_check_branch
      %48 = sbr.rel (0) target = $region25
    $region24: #{tpu_custom_call.1} parent=1 // pred_region
      %49 = dma.done [#allocation6], 128
    $region25: #{tpu_custom_call.1} parent=1 // pred_fallthru
      _
    %v50 = vld [vmem:[#allocation5] sm:$0xff]
    %v51 = vmul.f32 %v50, 0.5
    %v52 = vmul.f32 %v51, 1.442695
    %v53 = vpow.pop %v52
    %v54 = vld [vmem:[#allocation2] sm:$0xff]
    %v55 = vld [vmem:[#allocation7] sm:$0xff]
    %v56 = vmul.f32 %v53, %v55
    %v57 = vadd.f32 %v54, %v56
    %58 = vst [vmem:[#allocation8] sm:$0xff] %v57
    // Predicated region
    $region26: #{tpu_custom_call.1} parent=1 // pred_check
      _
    $region27: #{tpu_custom_call.1} parent=1 // pred_check_branch
      %60 = sbr.rel (0) target = $region29
    $region28: #{tpu_custom_call.1} parent=1 // pred_region
      %s62 = ssub.s32 128, 128
      %63 = vsyncadd [#allocation4], %s62
      %s65 = sshll.u32 [#allocation8], 4
      %s66 = int_to_ptr.vmem [resolvable:$true] %s65
      %68 = dma.vmem_to_hbm [thread:$0]  %s66, 128, %s3, [#allocation4]
    $region29: #{tpu_custom_call.1} parent=1 // pred_fallthru
      _
    // Predicated region
    $region30: #{tpu_custom_call.1} parent=1 // pred_check
      _
    $region31: #{tpu_custom_call.1} parent=1 // pred_check_branch
      %70 = sbr.rel (0) target = $region33
    $region32: #{tpu_custom_call.1} parent=1 // pred_region
      %71 = dma.done [#allocation4], 128
    $region33: #{tpu_custom_call.1} parent=1 // pred_fallthru
      _
    %72 = vsyncpa [#allocation3], 1
    %73 = vsyncpa [#allocation6], 1
    %74 = vsyncpa [#allocation4], 1

</llo_original>
